<compile_context>
chip_gen: v6e
topology: v6e:2x2x1
jax: 0.10.0
libtpu: 0.0.40
codegen_flags: <defaults>
</compile_context>

<pallas_src>
import functools

import jax
import jax.numpy as jnp
from jax import lax
from jax.experimental import pallas as pl
from jax.experimental.pallas import tpu as pltpu


def _round_up(v, m):
  return (v + m - 1) // m * m


def _residual_block_kernel(x_ref, mask_ref, s1_ref, b1_ref, w1_ref,
                           s2_ref, b2_ref, w2_ref, *rest, W, has_proj):
  if has_proj:
    wsc_ref, o_ref = rest
  else:
    (o_ref,) = rest
    wsc_ref = None

  L = x_ref.shape[-1]             # Nb * H * W  (lane axis, images concatenated)

  def patches(act):
    # act: (Cpad, L) f32 -> masked im2col patch matrix (9*Cpad, L) bf16.
    # Tap order t = ky*3 + kx matches the (tap, channel) weight column order.
    taps = []
    for t in range(9):
      dy, dx = t // 3 - 1, t % 3 - 1
      shift = (-(dy * W + dx)) % L
      taps.append(pltpu.roll(act, shift=shift, axis=1) if shift else act)
    # One sublane-aligned multiply zeroes every tap that wraps across a row /
    # image boundary (the conv's implicit zero padding); no per-tap broadcasts.
    p = jnp.concatenate(taps, axis=0) * mask_ref[...]
    return p.astype(jnp.bfloat16)

  # ---- BN1 (folded, eval mode) + ReLU ----  (channels on sublanes)
  a = jnp.maximum(x_ref[...] * s1_ref[...] + b1_ref[...], 0.0)

  # ---- shortcut: identity (specialized away) or 1x1 conv (bf16 MXU) ----
  if has_proj:
    r = jnp.dot(wsc_ref[...], a.astype(jnp.bfloat16),
                preferred_element_type=jnp.float32)
  else:
    r = a

  # ---- conv1: single im2col matmul (bf16 operands, f32 accumulation) ----
  c1 = jnp.dot(w1_ref[...], patches(a), preferred_element_type=jnp.float32)

  # ---- BN2 + ReLU ----
  b = jnp.maximum(c1 * s2_ref[...] + b2_ref[...], 0.0)

  # ---- conv2 (the 0.2 residual scale is folded into w2 in the wrapper) ----
  c2 = jnp.dot(w2_ref[...], patches(b), preferred_element_type=jnp.float32)

  # ---- residual combine: plain add, lane-dense store ----
  o_ref[...] = (c2 + r).astype(o_ref.dtype)


def _pick_block_batch(N, Cpad, HW, budget_bytes=24 * 1024 * 1024):
  """Largest per-step image count Nb (divisor of N) fitting a VMEM budget,
  preferring to keep >= 2 grid steps so both v7x TensorCores get work."""
  per_image = HW * Cpad * 4 * 48     # rough: x/out/mask/patch buffers, double-buffered
  max_nb = max(1, budget_bytes // max(per_image, 1))
  divs = [d for d in range(1, N + 1) if N % d == 0 and d <= max_nb] or [1]
  pref = [d for d in divs if N // d >= 2]
  return max(pref) if pref else max(divs)


def residual_block(x_nchw, params, *, eps=1e-5):
  """params: bn1/bn2 = (gamma, beta, running_mean, running_var), w1 (Co,Ci,3,3),
  w2 (Co,Co,3,3), wsc (Co,Ci,1,1) or None.  Input/output are NCHW (stride=1)."""
  N, Ci, H, W = x_nchw.shape
  Co = params["w1"].shape[0]
  HW = H * W
  has_proj = params["wsc"] is not None
  if not has_proj:
    assert Ci == Co, "identity shortcut requires ni == nf"

  # One common channel pad (multiple of 8) keeps the im2col concat, the MXU K
  # dim and the (single) border mask sublane-aligned for both convs.
  Cpad = _round_up(max(Ci, Co, 8), 8)

  def fold(bn, c):
    gamma, beta, mean, var = bn
    scale = gamma / jnp.sqrt(var + eps)
    shift = beta - mean * scale
    scale = jnp.pad(scale.astype(jnp.float32), (0, Cpad - c)).reshape(Cpad, 1)
    shift = jnp.pad(shift.astype(jnp.float32), (0, Cpad - c)).reshape(Cpad, 1)
    return scale, shift

  s1, b1 = fold(params["bn1"], Ci)
  s2, b2 = fold(params["bn2"], Co)

  def prep_w3x3(w, cin, scale=1.0):
    # OIHW (Co, cin, 3, 3) -> (Cpad, 9*Cpad) bf16, column order (tap, channel).
    w = jnp.transpose(w * scale, (0, 2, 3, 1))                        # (Co,3,3,cin)
    w = jnp.pad(w, ((0, Cpad - Co), (0, 0), (0, 0), (0, Cpad - cin)))
    return w.reshape(Cpad, 9 * Cpad).astype(jnp.bfloat16)

  w1 = prep_w3x3(params["w1"], Ci)
  w2 = prep_w3x3(params["w2"], Co, scale=0.2)       # fold the 0.2 residual scale

  Nb = _pick_block_batch(N, Cpad, HW)
  L = Nb * HW
  n_steps = N // Nb

  # Activations as (Cpad, N*HW): channels on sublanes, (image, pixel) on lanes.
  x_flat = jnp.transpose(x_nchw.reshape(N, Ci, HW), (1, 0, 2)).reshape(Ci, N * HW)
  x_flat = jnp.pad(x_flat.astype(jnp.float32), ((0, Cpad - Ci), (0, 0)))

  # Border mask, pre-expanded to the (9*Cpad, L) patch-matrix shape so the
  # kernel applies it with one aligned multiply.
  yy, xx = jnp.meshgrid(jnp.arange(H), jnp.arange(W), indexing="ij")
  mask_rows = []
  for t in range(9):
    dy, dx = t // 3 - 1, t % 3 - 1
    valid = ((yy + dy >= 0) & (yy + dy < H) & (xx + dx >= 0) & (xx + dx < W))
    mask_rows.append(valid.reshape(HW))
  mask = jnp.stack(mask_rows).astype(jnp.float32)                    # (9, HW)
  mask = jnp.repeat(mask[:, None, :], Cpad, axis=1).reshape(9 * Cpad, HW)
  mask = jnp.tile(mask, (1, Nb))                                     # (9*Cpad, L)

  inputs = [x_flat, mask, s1, b1, w1, s2, b2, w2]
  in_specs = [
      pl.BlockSpec((Cpad, L), lambda n: (0, n)),          # x (Nb images / step)
      pl.BlockSpec((9 * Cpad, L), lambda n: (0, 0)),      # expanded border mask
      pl.BlockSpec((Cpad, 1), lambda n: (0, 0)),          # bn1 scale
      pl.BlockSpec((Cpad, 1), lambda n: (0, 0)),          # bn1 shift
      pl.BlockSpec((Cpad, 9 * Cpad), lambda n: (0, 0)),   # w1 (bf16)
      pl.BlockSpec((Cpad, 1), lambda n: (0, 0)),          # bn2 scale
      pl.BlockSpec((Cpad, 1), lambda n: (0, 0)),          # bn2 shift
      pl.BlockSpec((Cpad, 9 * Cpad), lambda n: (0, 0)),   # w2*0.2 (bf16)
  ]
  if has_proj:
    wsc = jnp.pad(params["wsc"][:, :, 0, 0],
                  ((0, Cpad - Co), (0, Cpad - Ci))).astype(jnp.bfloat16)
    inputs.append(wsc)
    in_specs.append(pl.BlockSpec((Cpad, Cpad), lambda n: (0, 0)))

  kernel = functools.partial(_residual_block_kernel, W=W, has_proj=has_proj)
  out_flat = pl.pallas_call(
      kernel,
      out_shape=jax.ShapeDtypeStruct((Cpad, N * HW), jnp.float32),
      grid_spec=pltpu.PrefetchScalarGridSpec(
          num_scalar_prefetch=0,
          grid=(n_steps,),
          in_specs=in_specs,
          out_specs=pl.BlockSpec((Cpad, L), lambda n: (0, n)),
      ),
      compiler_params=pltpu.CompilerParams(
          dimension_semantics=("parallel",),
          vmem_limit_bytes=48 * 1024 * 1024),
  )(*inputs)

  out = out_flat[:Co].reshape(Co, N, HW)
  return jnp.transpose(out, (1, 0, 2)).reshape(N, Co, H, W)   # back to NCHW


def reference(x, params, *, eps=1e-5):
  """Pure-JAX NCHW reference matching the PyTorch forward (eval-mode BN)."""
  def bn(x, gamma, beta, mean, var):
    g = gamma[None, :, None, None]
    b = beta[None, :, None, None]
    m = mean[None, :, None, None]
    v = var[None, :, None, None]
    return g * (x - m) / jnp.sqrt(v + eps) + b

  def conv(x, w, pad):
    return lax.conv_general_dilated(
        x, w, (1, 1), [(pad, pad), (pad, pad)],
        dimension_numbers=("NCHW", "OIHW", "NCHW"))

  a = jax.nn.relu(bn(x, *params["bn1"]))
  r = a if params["wsc"] is None else conv(a, params["wsc"], 0)
  c1 = conv(a, params["w1"], 1)
  c2 = conv(jax.nn.relu(bn(c1, *params["bn2"])), params["w2"], 1)
  return c2 * 0.2 + r


if __name__ == "__main__":
  key = jax.random.PRNGKey(0)
  N, H, W = 2, 16, 16

  def bn_params(k, c):
    k1, k2, k3, k4 = jax.random.split(k, 4)
    gamma = 1.0 + 0.1 * jax.random.normal(k1, (c,), jnp.float32)
    beta = 0.1 * jax.random.normal(k2, (c,), jnp.float32)
    mean = 0.1 * jax.random.normal(k3, (c,), jnp.float32)
    var = jnp.abs(jax.random.normal(k4, (c,), jnp.float32)) + 0.5
    return gamma, beta, mean, var

  # Test both shortcut variants: 1x1 projection (ni != nf) and identity (ni == nf).
  for case_i, (ni, nf) in enumerate([(4, 8), (8, 8)]):
    ks = jax.random.split(jax.random.fold_in(key, case_i), 6)
    x = jax.random.normal(ks[0], (N, ni, H, W), jnp.float32)
    params = {
        "bn1": bn_params(ks[1], ni),
        "w1": 0.1 * jax.random.normal(ks[2], (nf, ni, 3, 3), jnp.float32),
        "bn2": bn_params(ks[3], nf),
        "w2": 0.1 * jax.random.normal(ks[4], (nf, nf, 3, 3), jnp.float32),
        "wsc": (0.1 * jax.random.normal(ks[5], (nf, ni, 1, 1), jnp.float32)
                if ni != nf else None),
    }

    out = jax.block_until_ready(residual_block(x, params))
    ref = reference(x, params)
    assert out.shape == ref.shape, (out.shape, ref.shape)
    max_err = float(jnp.max(jnp.abs(out - ref)))
    # bf16 MXU operands with f32 accumulation -> relaxed tolerance vs f32 reference.
    assert jnp.allclose(out, ref, rtol=3e-2, atol=3e-2), f"case {ni}->{nf} max_err={max_err}"

  print("KERNEL_OK")
</pallas_src>

<mosaic_0001>
module attributes {stable_mosaic.version = 11 : i64} {
  func.func @_residual_block_kernel(%arg0: i32, %arg1: memref<8x256xf32, #tpu.memory_space<vmem>>, %arg2: memref<72x256xf32, #tpu.memory_space<vmem>>, %arg3: memref<8x1xf32, #tpu.memory_space<vmem>>, %arg4: memref<8x1xf32, #tpu.memory_space<vmem>>, %arg5: memref<8x72xbf16, #tpu.memory_space<vmem>>, %arg6: memref<8x1xf32, #tpu.memory_space<vmem>>, %arg7: memref<8x1xf32, #tpu.memory_space<vmem>>, %arg8: memref<8x72xbf16, #tpu.memory_space<vmem>>, %arg9: memref<8x8xbf16, #tpu.memory_space<vmem>>, %arg10: memref<8x256xf32, #tpu.memory_space<vmem>>) attributes {dimension_semantics = [#tpu.dimension_semantics<parallel>], iteration_bounds = array<i64: 2>, scalar_prefetch = 0 : i64, scratch_operands = 0 : i64, tpu.core_type = #tpu.core_type<tc>, window_params = [{transform_indices = @transform_0, window_bounds = array<i64: 8, 256>}, {pipeline_mode = #tpu.pipeline_mode<synchronous>, transform_indices = @transform_1, window_bounds = array<i64: 72, 256>}, {pipeline_mode = #tpu.pipeline_mode<synchronous>, transform_indices = @transform_2, window_bounds = array<i64: 8, 1>}, {pipeline_mode = #tpu.pipeline_mode<synchronous>, transform_indices = @transform_3, window_bounds = array<i64: 8, 1>}, {pipeline_mode = #tpu.pipeline_mode<synchronous>, transform_indices = @transform_4, window_bounds = array<i64: 8, 72>}, {pipeline_mode = #tpu.pipeline_mode<synchronous>, transform_indices = @transform_5, window_bounds = array<i64: 8, 1>}, {pipeline_mode = #tpu.pipeline_mode<synchronous>, transform_indices = @transform_6, window_bounds = array<i64: 8, 1>}, {pipeline_mode = #tpu.pipeline_mode<synchronous>, transform_indices = @transform_7, window_bounds = array<i64: 8, 72>}, {pipeline_mode = #tpu.pipeline_mode<synchronous>, transform_indices = @transform_8, window_bounds = array<i64: 8, 8>}, {transform_indices = @transform_9, window_bounds = array<i64: 8, 256>}]} {
    %c0 = arith.constant 0 : index
    %c0_0 = arith.constant 0 : index
    %0 = vector.load %arg1[%c0, %c0_0] : memref<8x256xf32, #tpu.memory_space<vmem>>, vector<8x256xf32>
    %c0_1 = arith.constant 0 : index
    %c0_2 = arith.constant 0 : index
    %1 = vector.load %arg3[%c0_1, %c0_2] : memref<8x1xf32, #tpu.memory_space<vmem>>, vector<8x1xf32>
    %2 = vector.broadcast %1 : vector<8x1xf32> to vector<8x256xf32>
    %3 = arith.mulf %0, %2 : vector<8x256xf32>
    %c0_3 = arith.constant 0 : index
    %c0_4 = arith.constant 0 : index
    %4 = vector.load %arg4[%c0_3, %c0_4] : memref<8x1xf32, #tpu.memory_space<vmem>>, vector<8x1xf32>
    %5 = vector.broadcast %4 : vector<8x1xf32> to vector<8x256xf32>
    %6 = arith.addf %3, %5 : vector<8x256xf32>
    %cst = arith.constant 0.000000e+00 : f32
    %7 = vector.broadcast %cst : f32 to vector<8x256xf32>
    %8 = arith.maximumf %6, %7 : vector<8x256xf32>
    %c0_5 = arith.constant 0 : index
    %c0_6 = arith.constant 0 : index
    %9 = vector.load %arg9[%c0_5, %c0_6] : memref<8x8xbf16, #tpu.memory_space<vmem>>, vector<8x8xbf16>
    %10 = arith.truncf %8 : vector<8x256xf32> to vector<8x256xbf16>
    %cst_7 = arith.constant dense<0.000000e+00> : vector<8x256xf32>
    %11 = tpu.matmul %9, %10, %cst_7 {dimension_numbers = #tpu.dot_dimension_numbers<[1], [0], [0], [1], [0, 0, 1, 1], [], []>} : vector<8x8xbf16>, vector<8x256xbf16>, vector<8x256xf32> -> vector<8x256xf32>
    %c0_8 = arith.constant 0 : index
    %c0_9 = arith.constant 0 : index
    %12 = vector.load %arg5[%c0_8, %c0_9] : memref<8x72xbf16, #tpu.memory_space<vmem>>, vector<8x72xbf16>
    %c17_i32 = arith.constant 17 : i32
    %13 = tpu.dynamic_rotate %8 by %c17_i32 dim 1 : vector<8x256xf32>, i32 -> vector<8x256xf32>
    %c16_i32 = arith.constant 16 : i32
    %14 = tpu.dynamic_rotate %8 by %c16_i32 dim 1 : vector<8x256xf32>, i32 -> vector<8x256xf32>
    %c15_i32 = arith.constant 15 : i32
    %15 = tpu.dynamic_rotate %8 by %c15_i32 dim 1 : vector<8x256xf32>, i32 -> vector<8x256xf32>
    %c1_i32 = arith.constant 1 : i32
    %16 = tpu.dynamic_rotate %8 by %c1_i32 dim 1 : vector<8x256xf32>, i32 -> vector<8x256xf32>
    %c255_i32 = arith.constant 255 : i32
    %17 = tpu.dynamic_rotate %8 by %c255_i32 dim 1 : vector<8x256xf32>, i32 -> vector<8x256xf32>
    %c241_i32 = arith.constant 241 : i32
    %18 = tpu.dynamic_rotate %8 by %c241_i32 dim 1 : vector<8x256xf32>, i32 -> vector<8x256xf32>
    %c240_i32 = arith.constant 240 : i32
    %19 = tpu.dynamic_rotate %8 by %c240_i32 dim 1 : vector<8x256xf32>, i32 -> vector<8x256xf32>
    %c239_i32 = arith.constant 239 : i32
    %20 = tpu.dynamic_rotate %8 by %c239_i32 dim 1 : vector<8x256xf32>, i32 -> vector<8x256xf32>
    %21 = tpu.concatenate %13, %14, %15, %16, %8, %17, %18, %19, %20 in 0 : vector<8x256xf32>, vector<8x256xf32>, vector<8x256xf32>, vector<8x256xf32>, vector<8x256xf32>, vector<8x256xf32>, vector<8x256xf32>, vector<8x256xf32>, vector<8x256xf32> -> vector<72x256xf32>
    %c0_10 = arith.constant 0 : index
    %c0_11 = arith.constant 0 : index
    %22 = vector.load %arg2[%c0_10, %c0_11] : memref<72x256xf32, #tpu.memory_space<vmem>>, vector<72x256xf32>
    %23 = arith.mulf %21, %22 : vector<72x256xf32>
    %24 = arith.truncf %23 : vector<72x256xf32> to vector<72x256xbf16>
    %cst_12 = arith.constant dense<0.000000e+00> : vector<8x256xf32>
    %25 = tpu.matmul %12, %24, %cst_12 {dimension_numbers = #tpu.dot_dimension_numbers<[1], [0], [0], [1], [0, 0, 1, 1], [], []>} : vector<8x72xbf16>, vector<72x256xbf16>, vector<8x256xf32> -> vector<8x256xf32>
    %c0_13 = arith.constant 0 : index
    %c0_14 = arith.constant 0 : index
    %26 = vector.load %arg6[%c0_13, %c0_14] : memref<8x1xf32, #tpu.memory_space<vmem>>, vector<8x1xf32>
    %27 = vector.broadcast %26 : vector<8x1xf32> to vector<8x256xf32>
    %28 = arith.mulf %25, %27 : vector<8x256xf32>
    %c0_15 = arith.constant 0 : index
    %c0_16 = arith.constant 0 : index
    %29 = vector.load %arg7[%c0_15, %c0_16] : memref<8x1xf32, #tpu.memory_space<vmem>>, vector<8x1xf32>
    %30 = vector.broadcast %29 : vector<8x1xf32> to vector<8x256xf32>
    %31 = arith.addf %28, %30 : vector<8x256xf32>
    %cst_17 = arith.constant 0.000000e+00 : f32
    %32 = vector.broadcast %cst_17 : f32 to vector<8x256xf32>
    %33 = arith.maximumf %31, %32 : vector<8x256xf32>
    %c0_18 = arith.constant 0 : index
    %c0_19 = arith.constant 0 : index
    %34 = vector.load %arg8[%c0_18, %c0_19] : memref<8x72xbf16, #tpu.memory_space<vmem>>, vector<8x72xbf16>
    %c17_i32_20 = arith.constant 17 : i32
    %35 = tpu.dynamic_rotate %33 by %c17_i32_20 dim 1 : vector<8x256xf32>, i32 -> vector<8x256xf32>
    %c16_i32_21 = arith.constant 16 : i32
    %36 = tpu.dynamic_rotate %33 by %c16_i32_21 dim 1 : vector<8x256xf32>, i32 -> vector<8x256xf32>
    %c15_i32_22 = arith.constant 15 : i32
    %37 = tpu.dynamic_rotate %33 by %c15_i32_22 dim 1 : vector<8x256xf32>, i32 -> vector<8x256xf32>
    %c1_i32_23 = arith.constant 1 : i32
    %38 = tpu.dynamic_rotate %33 by %c1_i32_23 dim 1 : vector<8x256xf32>, i32 -> vector<8x256xf32>
    %c255_i32_24 = arith.constant 255 : i32
    %39 = tpu.dynamic_rotate %33 by %c255_i32_24 dim 1 : vector<8x256xf32>, i32 -> vector<8x256xf32>
    %c241_i32_25 = arith.constant 241 : i32
    %40 = tpu.dynamic_rotate %33 by %c241_i32_25 dim 1 : vector<8x256xf32>, i32 -> vector<8x256xf32>
    %c240_i32_26 = arith.constant 240 : i32
    %41 = tpu.dynamic_rotate %33 by %c240_i32_26 dim 1 : vector<8x256xf32>, i32 -> vector<8x256xf32>
    %c239_i32_27 = arith.constant 239 : i32
    %42 = tpu.dynamic_rotate %33 by %c239_i32_27 dim 1 : vector<8x256xf32>, i32 -> vector<8x256xf32>
    %43 = tpu.concatenate %35, %36, %37, %38, %33, %39, %40, %41, %42 in 0 : vector<8x256xf32>, vector<8x256xf32>, vector<8x256xf32>, vector<8x256xf32>, vector<8x256xf32>, vector<8x256xf32>, vector<8x256xf32>, vector<8x256xf32>, vector<8x256xf32> -> vector<72x256xf32>
    %c0_28 = arith.constant 0 : index
    %c0_29 = arith.constant 0 : index
    %44 = vector.load %arg2[%c0_28, %c0_29] : memref<72x256xf32, #tpu.memory_space<vmem>>, vector<72x256xf32>
    %45 = arith.mulf %43, %44 : vector<72x256xf32>
    %46 = arith.truncf %45 : vector<72x256xf32> to vector<72x256xbf16>
    %cst_30 = arith.constant dense<0.000000e+00> : vector<8x256xf32>
    %47 = tpu.matmul %34, %46, %cst_30 {dimension_numbers = #tpu.dot_dimension_numbers<[1], [0], [0], [1], [0, 0, 1, 1], [], []>} : vector<8x72xbf16>, vector<72x256xbf16>, vector<8x256xf32> -> vector<8x256xf32>
    %48 = arith.addf %47, %11 : vector<8x256xf32>
    %c0_31 = arith.constant 0 : index
    %c0_32 = arith.constant 0 : index
    %49 = vector.load %arg10[%c0_31, %c0_32] : memref<8x256xf32, #tpu.memory_space<vmem>>, vector<8x256xf32>
    tpu.vector_store %arg10[%c0_31, %c0_32], %48 {strides = array<i32>} : memref<8x256xf32, #tpu.memory_space<vmem>>, vector<8x256xf32>,
    return
  }
  func.func @transform_0(%arg0: i32) -> (i32, i32) {
    %c0_i32 = arith.constant 0 : i32
    %c0_i32_0 = arith.constant 0 : i32
    return %c0_i32, %arg0 : i32, i32
  }
  func.func @transform_1(%arg0: i32) -> (i32, i32) {
    %c0_i32 = arith.constant 0 : i32
    %c0_i32_0 = arith.constant 0 : i32
    %c0_i32_1 = arith.constant 0 : i32
    return %c0_i32, %c0_i32_0 : i32, i32
  }
  func.func @transform_2(%arg0: i32) -> (i32, i32) {
    %c0_i32 = arith.constant 0 : i32
    %c0_i32_0 = arith.constant 0 : i32
    %c0_i32_1 = arith.constant 0 : i32
    return %c0_i32, %c0_i32_0 : i32, i32
  }
  func.func @transform_3(%arg0: i32) -> (i32, i32) {
    %c0_i32 = arith.constant 0 : i32
    %c0_i32_0 = arith.constant 0 : i32
    %c0_i32_1 = arith.constant 0 : i32
    return %c0_i32, %c0_i32_0 : i32, i32
  }
  func.func @transform_4(%arg0: i32) -> (i32, i32) {
    %c0_i32 = arith.constant 0 : i32
    %c0_i32_0 = arith.constant 0 : i32
    %c0_i32_1 = arith.constant 0 : i32
    return %c0_i32, %c0_i32_0 : i32, i32
  }
  func.func @transform_5(%arg0: i32) -> (i32, i32) {
    %c0_i32 = arith.constant 0 : i32
    %c0_i32_0 = arith.constant 0 : i32
    %c0_i32_1 = arith.constant 0 : i32
    return %c0_i32, %c0_i32_0 : i32, i32
  }
  func.func @transform_6(%arg0: i32) -> (i32, i32) {
    %c0_i32 = arith.constant 0 : i32
    %c0_i32_0 = arith.constant 0 : i32
    %c0_i32_1 = arith.constant 0 : i32
    return %c0_i32, %c0_i32_0 : i32, i32
  }
  func.func @transform_7(%arg0: i32) -> (i32, i32) {
    %c0_i32 = arith.constant 0 : i32
    %c0_i32_0 = arith.constant 0 : i32
    %c0_i32_1 = arith.constant 0 : i32
    return %c0_i32, %c0_i32_0 : i32, i32
  }
  func.func @transform_8(%arg0: i32) -> (i32, i32) {
    %c0_i32 = arith.constant 0 : i32
    %c0_i32_0 = arith.constant 0 : i32
    %c0_i32_1 = arith.constant 0 : i32
    return %c0_i32, %c0_i32_0 : i32, i32
  }
  func.func @transform_9(%arg0: i32) -> (i32, i32) {
    %c0_i32 = arith.constant 0 : i32
    %c0_i32_0 = arith.constant 0 : i32
    return %c0_i32, %arg0 : i32, i32
  }
}

</mosaic_0001>

<llo_original>
// kernel: tpu_custom_call.1
$region0: #{tpu_custom_call.1}
  #allocation0 [shape = 'u32[]', space=smem, size = 0x4, offset = 0x4, fixed_abs, tag = 'smem constant byte address 0x4 - core index']
  #allocation1 [shape = 'u32[144,128]{1,0:T(1,128)}', space=vmem, size = 0x12000, scoped, tag = 'internal scratch']
  %s0 = inlined_call_operand.vmem [shape: f32[8,512], index: 0, kind: input, shape index: {}]
  %s1 = inlined_call_operand.hbm [shape: f32[72,256], index: 1, kind: input, shape index: {}]
  %s2 = inlined_call_operand.vmem [shape: f32[8,1], index: 2, kind: input, shape index: {}]
  %s3 = inlined_call_operand.vmem [shape: f32[8,1], index: 3, kind: input, shape index: {}]
  %s4 = inlined_call_operand.vmem [shape: bf16[8,72], index: 4, kind: input, shape index: {}]
  %s5 = inlined_call_operand.vmem [shape: f32[8,1], index: 5, kind: input, shape index: {}]
  %s6 = inlined_call_operand.vmem [shape: f32[8,1], index: 6, kind: input, shape index: {}]
  %s7 = inlined_call_operand.vmem [shape: bf16[8,72], index: 7, kind: input, shape index: {}]
  %s8 = inlined_call_operand.vmem [shape: bf16[8,8], index: 8, kind: input, shape index: {}]
  %s9 = inlined_call_operand.hbm [shape: f32[8,512], index: 9, kind: output, shape index: {}]
  %s10 = sld [smem:[#allocation0]]
  $region73: #{tpu_custom_call.1} parent=0
    _
  %s12 = ssub.s32 1, %s10
  %s13 = scalar_select 0, %s12, %s10
  $region1: #{tpu_custom_call.1} parent=0
    #allocation2 [shape = 'u8[73728]{0}', space=vmem, size = 0x12000, scoped, tag = 'input window, operand 1, single buffered']
    #allocation3 [shape = 's32[2]{0}', space=sflag, size = 0x8, scoped, tag = 'scoped memory for tpu_custom_call.1']
    #allocation4 [shape = 's32[2]{0}', space=sflag, size = 0x8, scoped, tag = 'scoped memory for tpu_custom_call.1']
    #allocation5 [shape = 'u8[16384]{0}', space=vmem, size = 0x4000, scoped, tag = 'output window, operand 0']
    %14 = vsyncpa [#allocation3], 0
    %15 = vsyncpa [#allocation4], 0
    %s16 = scalar_lea.sflag [#allocation4], 1
    %17 = vsyncpa %s16, 0
    loop: start=0, step=1, limit=4
    $region2: #{tpu_custom_call.1} parent=1 // loop_pre_header
      _
    $region3: #{tpu_custom_call.1} parent=1 // loop_header
      %s19 = sphi 0, %s23
      %p20 = scmp.ge.s32.totalorder %s19, 4
      %s29 = sphi 0, %s31
      %s32 = sphi 0, %s29
      %s33 = sphi 0, %s32
      %s49 = sphi 0, %s33
      %s53 = sphi 0, %s53
      %s55 = sphi 0, %s53
      %s56 = sphi 0, %s55
      %s70 = sphi 0, %s56
      %s74 = sphi 0, %s74
      %s76 = sphi 0, %s74
      %s77 = sphi 0, %s76
      %s91 = sphi 0, %s77
      %s95 = sphi 0, %s95
      %s97 = sphi 0, %s95
      %s98 = sphi 0, %s97
      %s112 = sphi 0, %s98
      %s116 = sphi 0, %s116
      %s118 = sphi 0, %s116
      %s119 = sphi 0, %s118
      %s133 = sphi 0, %s119
      %s137 = sphi 0, %s137
      %s139 = sphi 0, %s137
      %s140 = sphi 0, %s139
      %s154 = sphi 0, %s140
      %s158 = sphi 0, %s158
      %s160 = sphi 0, %s158
      %s161 = sphi 0, %s160
      %s175 = sphi 0, %s161
      %s179 = sphi 0, %s179
      %s181 = sphi 0, %s179
      %s182 = sphi 0, %s181
      %s196 = sphi 0, %s182
      %s200 = sphi 0, %s200
      %s202 = sphi 0, %s200
      %s203 = sphi 0, %s202
      %s217 = sphi 0, %s203
      %s223 = sphi 0, %s225
      %s226 = sphi 0, %s223
      %s227 = sphi 0, %s226
      %s243 = sphi 0, %s227
    $region4: #{tpu_custom_call.1} parent=1 // loop_header_branch
      %22 = sbr.rel (%p20) target = $region8
    $region5: #{tpu_custom_call.1} parent=1 // loop_body
      %s24 = ssub.s32 %s19, 1
      %s25 = ssub.s32 %s19, 2
      %s26 = sadd.s32 %s19, 1
      %s27 = ssub.s32 %s19, %s26
      %p28 = scmp.eq.s32.totalorder %s27, 0
      %s30 = sadd.s32 %s29, 1
      %s31 = scalar_select %p28, %s29, %s30
      %p34 = pneg %p28
      %p35 = scmp.eq.s32.totalorder %s19, 1
      %p36 = por %p34, %p35
      %p37 = scmp.ne.s32.totalorder %s29, %s32
      %p38 = scmp.eq.s32.totalorder %s19, 0
      %p39 = por %p37, %p38
      %p40 = scmp.ne.s32.totalorder %s29, %s32
      %p41 = scmp.eq.s32.totalorder %s24, 1
      %p42 = por %p40, %p41
      %p43 = scmp.ne.s32.totalorder %s32, %s33
      %p44 = scmp.eq.s32.totalorder %s24, 0
      %p45 = por %p43, %p44
      %p46 = scmp.ne.s32.totalorder %s32, %s33
      %p47 = scmp.eq.s32.totalorder %s25, 1
      %p48 = por %p46, %p47
      %p50 = scmp.ne.s32.totalorder %s33, %s49
      %p51 = scmp.eq.s32.totalorder %s25, 0
      %p52 = por %p50, %p51
      %s54 = sadd.s32 %s53, 1
      %p57 = scmp.eq.s32.totalorder %s19, 1
      %p58 = scmp.ne.s32.totalorder %s53, %s55
      %p59 = scmp.eq.s32.totalorder %s19, 0
      %p60 = por %p58, %p59
      %p61 = scmp.ne.s32.totalorder %s53, %s55
      %p62 = scmp.eq.s32.totalorder %s24, 1
      %p63 = por %p61, %p62
      %p64 = scmp.ne.s32.totalorder %s55, %s56
      %p65 = scmp.eq.s32.totalorder %s24, 0
      %p66 = por %p64, %p65
      %p67 = scmp.ne.s32.totalorder %s55, %s56
      %p68 = scmp.eq.s32.totalorder %s25, 1
      %p69 = por %p67, %p68
      %p71 = scmp.ne.s32.totalorder %s56, %s70
      %p72 = scmp.eq.s32.totalorder %s25, 0
      %p73 = por %p71, %p72
      %s75 = sadd.s32 %s74, 1
      %p78 = scmp.eq.s32.totalorder %s19, 1
      %p79 = scmp.ne.s32.totalorder %s74, %s76
      %p80 = scmp.eq.s32.totalorder %s19, 0
      %p81 = por %p79, %p80
      %p82 = scmp.ne.s32.totalorder %s74, %s76
      %p83 = scmp.eq.s32.totalorder %s24, 1
      %p84 = por %p82, %p83
      %p85 = scmp.ne.s32.totalorder %s76, %s77
      %p86 = scmp.eq.s32.totalorder %s24, 0
      %p87 = por %p85, %p86
      %p88 = scmp.ne.s32.totalorder %s76, %s77
      %p89 = scmp.eq.s32.totalorder %s25, 1
      %p90 = por %p88, %p89
      %p92 = scmp.ne.s32.totalorder %s77, %s91
      %p93 = scmp.eq.s32.totalorder %s25, 0
      %p94 = por %p92, %p93
      %s96 = sadd.s32 %s95, 1
      %p99 = scmp.eq.s32.totalorder %s19, 1
      %p100 = scmp.ne.s32.totalorder %s95, %s97
      %p101 = scmp.eq.s32.totalorder %s19, 0
      %p102 = por %p100, %p101
      %p103 = scmp.ne.s32.totalorder %s95, %s97
      %p104 = scmp.eq.s32.totalorder %s24, 1
      %p105 = por %p103, %p104
      %p106 = scmp.ne.s32.totalorder %s97, %s98
      %p107 = scmp.eq.s32.totalorder %s24, 0
      %p108 = por %p106, %p107
      %p109 = scmp.ne.s32.totalorder %s97, %s98
      %p110 = scmp.eq.s32.totalorder %s25, 1
      %p111 = por %p109, %p110
      %p113 = scmp.ne.s32.totalorder %s98, %s112
      %p114 = scmp.eq.s32.totalorder %s25, 0
      %p115 = por %p113, %p114
      %s117 = sadd.s32 %s116, 1
      %p120 = scmp.eq.s32.totalorder %s19, 1
      %p121 = scmp.ne.s32.totalorder %s116, %s118
      %p122 = scmp.eq.s32.totalorder %s19, 0
      %p123 = por %p121, %p122
      %p124 = scmp.ne.s32.totalorder %s116, %s118
      %p125 = scmp.eq.s32.totalorder %s24, 1
      %p126 = por %p124, %p125
      %p127 = scmp.ne.s32.totalorder %s118, %s119
      %p128 = scmp.eq.s32.totalorder %s24, 0
      %p129 = por %p127, %p128
      %p130 = scmp.ne.s32.totalorder %s118, %s119
      %p131 = scmp.eq.s32.totalorder %s25, 1
      %p132 = por %p130, %p131
      %p134 = scmp.ne.s32.totalorder %s119, %s133
      %p135 = scmp.eq.s32.totalorder %s25, 0
      %p136 = por %p134, %p135
      %s138 = sadd.s32 %s137, 1
      %p141 = scmp.eq.s32.totalorder %s19, 1
      %p142 = scmp.ne.s32.totalorder %s137, %s139
      %p143 = scmp.eq.s32.totalorder %s19, 0
      %p144 = por %p142, %p143
      %p145 = scmp.ne.s32.totalorder %s137, %s139
      %p146 = scmp.eq.s32.totalorder %s24, 1
      %p147 = por %p145, %p146
      %p148 = scmp.ne.s32.totalorder %s139, %s140
      %p149 = scmp.eq.s32.totalorder %s24, 0
      %p150 = por %p148, %p149
      %p151 = scmp.ne.s32.totalorder %s139, %s140
      %p152 = scmp.eq.s32.totalorder %s25, 1
      %p153 = por %p151, %p152
      %p155 = scmp.ne.s32.totalorder %s140, %s154
      %p156 = scmp.eq.s32.totalorder %s25, 0
      %p157 = por %p155, %p156
      %s159 = sadd.s32 %s158, 1
      %p162 = scmp.eq.s32.totalorder %s19, 1
      %p163 = scmp.ne.s32.totalorder %s158, %s160
      %p164 = scmp.eq.s32.totalorder %s19, 0
      %p165 = por %p163, %p164
      %p166 = scmp.ne.s32.totalorder %s158, %s160
      %p167 = scmp.eq.s32.totalorder %s24, 1
      %p168 = por %p166, %p167
      %p169 = scmp.ne.s32.totalorder %s160, %s161
      %p170 = scmp.eq.s32.totalorder %s24, 0
      %p171 = por %p169, %p170
      %p172 = scmp.ne.s32.totalorder %s160, %s161
      %p173 = scmp.eq.s32.totalorder %s25, 1
      %p174 = por %p172, %p173
      %p176 = scmp.ne.s32.totalorder %s161, %s175
      %p177 = scmp.eq.s32.totalorder %s25, 0
      %p178 = por %p176, %p177
      %s180 = sadd.s32 %s179, 1
      %p183 = scmp.eq.s32.totalorder %s19, 1
      %p184 = scmp.ne.s32.totalorder %s179, %s181
      %p185 = scmp.eq.s32.totalorder %s19, 0
      %p186 = por %p184, %p185
      %p187 = scmp.ne.s32.totalorder %s179, %s181
      %p188 = scmp.eq.s32.totalorder %s24, 1
      %p189 = por %p187, %p188
      %p190 = scmp.ne.s32.totalorder %s181, %s182
      %p191 = scmp.eq.s32.totalorder %s24, 0
      %p192 = por %p190, %p191
      %p193 = scmp.ne.s32.totalorder %s181, %s182
      %p194 = scmp.eq.s32.totalorder %s25, 1
      %p195 = por %p193, %p194
      %p197 = scmp.ne.s32.totalorder %s182, %s196
      %p198 = scmp.eq.s32.totalorder %s25, 0
      %p199 = por %p197, %p198
      %s201 = sadd.s32 %s200, 1
      %p204 = scmp.eq.s32.totalorder %s19, 1
      %p205 = scmp.ne.s32.totalorder %s200, %s202
      %p206 = scmp.eq.s32.totalorder %s19, 0
      %p207 = por %p205, %p206
      %p208 = scmp.ne.s32.totalorder %s200, %s202
      %p209 = scmp.eq.s32.totalorder %s24, 1
      %p210 = por %p208, %p209
      %p211 = scmp.ne.s32.totalorder %s202, %s203
      %p212 = scmp.eq.s32.totalorder %s24, 0
      %p213 = por %p211, %p212
      %p214 = scmp.ne.s32.totalorder %s202, %s203
      %p215 = scmp.eq.s32.totalorder %s25, 1
      %p216 = por %p214, %p215
      %p218 = scmp.ne.s32.totalorder %s203, %s217
      %p219 = scmp.eq.s32.totalorder %s25, 0
      %p220 = por %p218, %p219
      %s221 = ssub.s32 %s19, %s26
      %p222 = scmp.eq.s32.totalorder %s221, 0
      %s224 = sadd.s32 %s223, 1
      %s225 = scalar_select %p222, %s223, %s224
      %p228 = pneg %p222
      %p229 = scmp.eq.s32.totalorder %s19, 1
      %p230 = por %p228, %p229
      %p231 = scmp.ne.s32.totalorder %s223, %s226
      %p232 = scmp.eq.s32.totalorder %s19, 0
      %p233 = por %p231, %p232
      %p234 = scmp.ne.s32.totalorder %s223, %s226
      %p235 = scmp.eq.s32.totalorder %s24, 1
      %p236 = por %p234, %p235
      %p237 = scmp.ne.s32.totalorder %s226, %s227
      %p238 = scmp.eq.s32.totalorder %s24, 0
      %p239 = por %p237, %p238
      %p240 = scmp.ne.s32.totalorder %s226, %s227
      %p241 = scmp.eq.s32.totalorder %s25, 1
      %p242 = por %p240, %p241
      %p244 = scmp.ne.s32.totalorder %s227, %s243
      %p245 = scmp.eq.s32.totalorder %s25, 0
      %p246 = por %p244, %p245
      %p247 = scmp.le.s32.totalorder 1, %s19
      %p248 = scmp.lt.s32.totalorder %s19, 3
      %p249 = pnand %p247, %p248
      %p250 = pneg %p249
      // Predicated region
      $region9: #{tpu_custom_call.1} parent=5 // pred_check
        _
      $region10: #{tpu_custom_call.1} parent=5 // pred_check_branch
        %252 = sbr.rel (%p249) target = $region12
      $region11: #{tpu_custom_call.1} parent=5 // pred_region
        %s253 = ssub.s32 %s19, 1
        // Predicated region
        $region13: #{tpu_custom_call.1} parent=11 // pred_check
          %p254 = pneg %p66
        $region14: #{tpu_custom_call.1} parent=11 // pred_check_branch
          %256 = sbr.rel (%p254) target = $region16
        $region15: #{tpu_custom_call.1} parent=11 // pred_region
          %s258 = ssub.s32 2304, 2304
          %259 = vsyncadd [#allocation3], %s258
          %s260 = sshll.u32 [#allocation2], 4
          %s261 = int_to_ptr.vmem [resolvable:$true] %s260
          %266 = dma.hbm_to_vmem [thread:$0]  %s1, 2304, %s261, [#allocation3], 256, 256, 16
        $region16: #{tpu_custom_call.1} parent=11 // pred_fallthru
          _
        // Predicated region
        $region17: #{tpu_custom_call.1} parent=11 // pred_check
          %p267 = pneg %p87
        $region18: #{tpu_custom_call.1} parent=11 // pred_check_branch
          %269 = sbr.rel (%p267) target = $region20
        $region19: #{tpu_custom_call.1} parent=11 // pred_region
          _
        $region20: #{tpu_custom_call.1} parent=11 // pred_fallthru
          _
        // Predicated region
        $region21: #{tpu_custom_call.1} parent=11 // pred_check
          %p270 = pneg %p108
        $region22: #{tpu_custom_call.1} parent=11 // pred_check_branch
          %272 = sbr.rel (%p270) target = $region24
        $region23: #{tpu_custom_call.1} parent=11 // pred_region
          _
        $region24: #{tpu_custom_call.1} parent=11 // pred_fallthru
          _
        // Predicated region
        $region25: #{tpu_custom_call.1} parent=11 // pred_check
          %p273 = pneg %p129
        $region26: #{tpu_custom_call.1} parent=11 // pred_check_branch
          %275 = sbr.rel (%p273) target = $region28
        $region27: #{tpu_custom_call.1} parent=11 // pred_region
          _
        $region28: #{tpu_custom_call.1} parent=11 // pred_fallthru
          _
        // Predicated region
        $region29: #{tpu_custom_call.1} parent=11 // pred_check
          %p276 = pneg %p150
        $region30: #{tpu_custom_call.1} parent=11 // pred_check_branch
          %278 = sbr.rel (%p276) target = $region32
        $region31: #{tpu_custom_call.1} parent=11 // pred_region
          _
        $region32: #{tpu_custom_call.1} parent=11 // pred_fallthru
          _
        // Predicated region
        $region33: #{tpu_custom_call.1} parent=11 // pred_check
          %p279 = pneg %p171
        $region34: #{tpu_custom_call.1} parent=11 // pred_check_branch
          %281 = sbr.rel (%p279) target = $region36
        $region35: #{tpu_custom_call.1} parent=11 // pred_region
          _
        $region36: #{tpu_custom_call.1} parent=11 // pred_fallthru
          _
        // Predicated region
        $region37: #{tpu_custom_call.1} parent=11 // pred_check
          %p282 = pneg %p192
        $region38: #{tpu_custom_call.1} parent=11 // pred_check_branch
          %284 = sbr.rel (%p282) target = $region40
        $region39: #{tpu_custom_call.1} parent=11 // pred_region
          _
        $region40: #{tpu_custom_call.1} parent=11 // pred_fallthru
          _
        // Predicated region
        $region41: #{tpu_custom_call.1} parent=11 // pred_check
          %p285 = pneg %p213
        $region42: #{tpu_custom_call.1} parent=11 // pred_check_branch
          %287 = sbr.rel (%p285) target = $region44
        $region43: #{tpu_custom_call.1} parent=11 // pred_region
          _
        $region44: #{tpu_custom_call.1} parent=11 // pred_fallthru
          _
      $region12: #{tpu_custom_call.1} parent=5 // pred_fallthru
        _
      %p288 = scmp.lt.s32.totalorder %s19, 2
      // Predicated region
      $region45: #{tpu_custom_call.1} parent=5 // pred_check
        %p289 = pneg %p288
      $region46: #{tpu_custom_call.1} parent=5 // pred_check_branch
        %291 = sbr.rel (%p289) target = $region48
      $region47: #{tpu_custom_call.1} parent=5 // pred_region
        // Predicated region
        $region49: #{tpu_custom_call.1} parent=47 // pred_check
          %p292 = pneg %p39
        $region50: #{tpu_custom_call.1} parent=47 // pred_check_branch
          %294 = sbr.rel (%p292) target = $region52
        $region51: #{tpu_custom_call.1} parent=47 // pred_region
          %s295 = smul.u32 2, %s19
          %p296 = scmp.lt.s32.totalorder %s295, 3
          %s297 = scalar_select %p296, %s295, 3
          %s298 = smul.addr %s297, 8
          %s299 = scalar_lea.vmem %s0, %s298
          %s300 = smul.u32 2, %s19
        $region52: #{tpu_custom_call.1} parent=47 // pred_fallthru
          _
      $region48: #{tpu_custom_call.1} parent=5 // pred_fallthru
        _
      %p301 = scmp.le.s32.totalorder 1, %s19
      %p302 = scmp.lt.s32.totalorder %s19, 3
      %p303 = pnand %p301, %p302
      %p304 = pneg %p303
      // Predicated region
      $region53: #{tpu_custom_call.1} parent=5 // pred_check
        _
      $region54: #{tpu_custom_call.1} parent=5 // pred_check_branch
        %306 = sbr.rel (%p303) target = $region56
      $region55: #{tpu_custom_call.1} parent=5 // pred_region
        %s307 = ssub.s32 %s19, 1
        // Predicated region
        $region57: #{tpu_custom_call.1} parent=55 // pred_check
          %p308 = pneg %p66
        $region58: #{tpu_custom_call.1} parent=55 // pred_check_branch
          %310 = sbr.rel (%p308) target = $region60
        $region59: #{tpu_custom_call.1} parent=55 // pred_region
          %311 = dma.done [#allocation3], 2304
        $region60: #{tpu_custom_call.1} parent=55 // pred_fallthru
          _
        %s312 = smul.u32 2, %s24
        %p313 = scmp.lt.s32.totalorder %s312, 3
        %s314 = scalar_select %p313, %s312, 3
        %s315 = smul.addr %s314, 8
        %s316 = scalar_lea.vmem %s0, %s315
        %p317 = pneg %p45
        %p318 = pneg %p42
        %p319 = pneg %p66
        %p320 = pneg %p63
        %p321 = pneg %p87
        %p322 = pneg %p84
        %p323 = pneg %p108
        %p324 = pneg %p105
        %p325 = pneg %p129
        %p326 = pneg %p126
        %p327 = pneg %p150
        %p328 = pneg %p147
        %p329 = pneg %p171
        %p330 = pneg %p168
        %p331 = pneg %p192
        %p332 = pneg %p189
        %p333 = pneg %p213
        %p334 = pneg %p210
        %p335 = pneg %p239
        %p336 = pneg %p236
        %s337 = sand.u32 %s226, 1
        %s338 = scalar_lea.sflag [#allocation4], %s337
        %s339 = sand.u32 %s226, 1
        %s340 = smul.addr %s339, 16
        %s341 = scalar_lea.vmem [#allocation5], %s340
        %s342 = smul.u32 2, %s24
        %p343 = scmp.lt.s32.totalorder %s342, 3
        %s344 = scalar_select %p343, %s342, 3
        %s345 = smul.addr %s344, 8
        %s346 = scalar_lea.vmem %s0, %s345
        %s347 = smul.u32 2, %s24
        %s348 = smul.u32 2, %s24
        %v350 = vld [vmem:[%s346] sm:$0xff]
        %v351 = vld [vmem:[%s346 + $0x8] sm:$0xff]
        %v352 = vld [vmem:[%s2] sm:$0xff]
        %354 = vset.pattern.permute.xlu0 0
        %355 = vperm.xlu0 %354, %v352
        %v356 = vpop.permute.xlu0 %355
        %v358 = vmul.f32 %v350, %v356
        %v359 = vmul.f32 %v351, %v356
        %v360 = vld [vmem:[%s3] sm:$0xff]
        %362 = vset.pattern.permute.xlu0 0
        %363 = vperm.xlu0 %362, %v360
        %v364 = vpop.permute.xlu0 %363
        %v366 = vadd.f32 %v358, %v364
        %v367 = vadd.f32 %v359, %v364
        %v368 = vmax.f32 %v366, 0.0
        %v369 = vmax.f32 %v367, 0.0
        %v370 = vld [vmem:[%s8] sm:$0xf]
        %v371 = vpack.c.bf16 %v368, %v368
        %v372 = vpack.c.bf16 %v369, %v369
        %vm373 = vcmask 64512
        %v375 = vsel %vm373, %v370, 0
        %vm377 = vcmask 1043456
        %v379 = vsel %vm377, %v371, 0
        %v382 = vsel %vm377, %v372, 0
        %384 = vmatprep.subr.bf16.mxu0 0
        %385 = vmatpush1.bf16.msra.mxu0 0
        %386 = vmatprep.subr.bf16.mxu0 0
        %387 = vmatpush1.bf16.msra.mxu0 0
        %388 = vmatprep.subr.bf16.mxu0 0
        %389 = vmatpush1.bf16.msra.mxu0 0
        %390 = vmatprep.subr.bf16.mxu0 0
        %391 = vmatpush1.bf16.msra.mxu0 0
        %392 = vmatprep.subr.bf16.mxu0 0
        %393 = vmatpush1.bf16.msra.mxu0 0
        %394 = vmatprep.subr.bf16.mxu0 0
        %395 = vmatpush1.bf16.msra.mxu0 0
        %396 = vmatprep.subr.bf16.mxu0 0
        %397 = vmatpush1.bf16.msra.mxu0 0
        %398 = vmatprep.subr.bf16.mxu0 %v382
        %399 = vmatpush1.bf16.msra.mxu0 %v379
        %400 = vmatprep.subr.bf16.mxu0 0
        %401 = vmatpush2.bf16.msra.mxu0 0
        %402 = vmatprep.subr.bf16.mxu0 0
        %403 = vmatpush2.bf16.msra.mxu0 0
        %404 = vmatprep.subr.bf16.mxu0 0
        %405 = vmatpush2.bf16.msra.mxu0 0
        %406 = vmatprep.subr.bf16.mxu0 0
        %407 = vmatpush2.bf16.msra.mxu0 0
        %408 = vmatprep.subr.bf16.mxu0 0
        %409 = vmatpush2.bf16.msra.mxu0 0
        %410 = vmatprep.subr.bf16.mxu0 0
        %411 = vmatpush2.bf16.msra.mxu0 0
        %412 = vmatprep.subr.bf16.mxu0 0
        %413 = vmatpush2.bf16.msra.mxu0 0
        %414 = vmatprep.subr.bf16.mxu0 0
        %415 = vmatpush2.bf16.msra.mxu0 0
        %416 = vmatprep.mubr.bf16.mxu0 0
        %417 = vmatmul.mubr.bf16.gmra.mxu0 %v375
        %v418 = vpop.f32.mrf.mxu0
        %v419 = vadd.f32 0.0, %v418
        %v420 = vpop.f32.mrf.mxu0
        %v421 = vadd.f32 0.0, %v420
        %v422 = vpop.f32.mrf.mxu0
        %v423 = vpop.f32.mrf.mxu0
        %424 = vdwg.mxu0
        %v425 = vld [vmem:[%s4] sm:$0xf]
        %426 = vrot.lane.b32.xlu0 %v368, 17
        %v427 = vpop.permute.xlu0 %426
        %428 = vrot.lane.b32.xlu0 %v369, 17
        %v429 = vpop.permute.xlu0 %428
        %v430 = vlaneseq
        %v431 = vand.u32 %v430, 127
        %vm432 = vcmp.lt.s32.totalorder %v431, 17
        %v433 = vsel %vm432, %v427, %v429
        %v434 = vsel %vm432, %v429, %v427
        %435 = vrot.lane.b32.xlu0 %v368, 16
        %v436 = vpop.permute.xlu0 %435
        %437 = vrot.lane.b32.xlu0 %v369, 16
        %v438 = vpop.permute.xlu0 %437
        %vm439 = vcmp.lt.s32.totalorder %v431, 16
        %v440 = vsel %vm439, %v436, %v438
        %v441 = vsel %vm439, %v438, %v436
        %442 = vrot.lane.b32.xlu0 %v368, 15
        %v443 = vpop.permute.xlu0 %442
        %444 = vrot.lane.b32.xlu0 %v369, 15
        %v445 = vpop.permute.xlu0 %444
        %vm446 = vcmp.lt.s32.totalorder %v431, 15
        %v447 = vsel %vm446, %v443, %v445
        %v448 = vsel %vm446, %v445, %v443
        %449 = vrot.lane.b32.xlu0 %v368, 1
        %v450 = vpop.permute.xlu0 %449
        %451 = vrot.lane.b32.xlu0 %v369, 1
        %v452 = vpop.permute.xlu0 %451
        %vm453 = vcmp.lt.s32.totalorder %v431, 1
        %v454 = vsel %vm453, %v450, %v452
        %v455 = vsel %vm453, %v452, %v450
        %456 = vrot.lane.b32.xlu0 %v368, 127
        %v457 = vpop.permute.xlu0 %456
        %458 = vrot.lane.b32.xlu0 %v369, 127
        %v459 = vpop.permute.xlu0 %458
        %vm460 = vcmp.lt.s32.totalorder %v431, 127
        %v461 = vsel %vm460, %v457, %v459
        %v462 = vsel %vm460, %v459, %v457
        %463 = vrot.lane.b32.xlu0 %v368, 113
        %v464 = vpop.permute.xlu0 %463
        %465 = vrot.lane.b32.xlu0 %v369, 113
        %v466 = vpop.permute.xlu0 %465
        %vm467 = vcmp.lt.s32.totalorder %v431, 113
        %v468 = vsel %vm467, %v464, %v466
        %v469 = vsel %vm467, %v466, %v464
        %470 = vrot.lane.b32.xlu0 %v368, 112
        %v471 = vpop.permute.xlu0 %470
        %472 = vrot.lane.b32.xlu0 %v369, 112
        %v473 = vpop.permute.xlu0 %472
        %vm474 = vcmp.lt.s32.totalorder %v431, 112
        %v475 = vsel %vm474, %v471, %v473
        %v476 = vsel %vm474, %v473, %v471
        %477 = vrot.lane.b32.xlu0 %v368, 111
        %v478 = vpop.permute.xlu0 %477
        %479 = vrot.lane.b32.xlu0 %v369, 111
        %v480 = vpop.permute.xlu0 %479
        %vm481 = vcmp.lt.s32.totalorder %v431, 111
        %v482 = vsel %vm481, %v478, %v480
        %v483 = vsel %vm481, %v480, %v478
        %v484 = vld [vmem:[#allocation2] sm:$0xff]
        %v485 = vld [vmem:[#allocation2 + $0x8] sm:$0xff]
        %v486 = vld [vmem:[#allocation2 + $0x10] sm:$0xff]
        %v487 = vld [vmem:[#allocation2 + $0x18] sm:$0xff]
        %v488 = vld [vmem:[#allocation2 + $0x20] sm:$0xff]
        %v489 = vld [vmem:[#allocation2 + $0x28] sm:$0xff]
        %v490 = vld [vmem:[#allocation2 + $0x30] sm:$0xff]
        %v491 = vld [vmem:[#allocation2 + $0x38] sm:$0xff]
        %v492 = vld [vmem:[#allocation2 + $0x40] sm:$0xff]
        %v493 = vld [vmem:[#allocation2 + $0x48] sm:$0xff]
        %v494 = vld [vmem:[#allocation2 + $0x50] sm:$0xff]
        %v495 = vld [vmem:[#allocation2 + $0x58] sm:$0xff]
        %v496 = vld [vmem:[#allocation2 + $0x60] sm:$0xff]
        %v497 = vld [vmem:[#allocation2 + $0x68] sm:$0xff]
        %v498 = vld [vmem:[#allocation2 + $0x70] sm:$0xff]
        %v499 = vld [vmem:[#allocation2 + $0x78] sm:$0xff]
        %v500 = vld [vmem:[#allocation2 + $0x80] sm:$0xff]
        %v501 = vld [vmem:[#allocation2 + $0x88] sm:$0xff]
        %v502 = vmul.f32 %v434, %v484
        %v503 = vmul.f32 %v433, %v485
        %v504 = vmul.f32 %v441, %v486
        %v505 = vmul.f32 %v440, %v487
        %v506 = vmul.f32 %v448, %v488
        %v507 = vmul.f32 %v447, %v489
        %v508 = vmul.f32 %v455, %v490
        %v509 = vmul.f32 %v454, %v491
        %v510 = vmul.f32 %v368, %v492
        %v511 = vmul.f32 %v369, %v493
        %v512 = vmul.f32 %v461, %v494
        %v513 = vmul.f32 %v462, %v495
        %v514 = vmul.f32 %v468, %v496
        %v515 = vmul.f32 %v469, %v497
        %v516 = vmul.f32 %v475, %v498
        %v517 = vmul.f32 %v476, %v499
        %v518 = vmul.f32 %v482, %v500
        %v519 = vmul.f32 %v483, %v501
        %v520 = vpack.c.bf16 %v504, %v502
        %v521 = vpack.c.bf16 %v505, %v503
        %v522 = vpack.c.bf16 %v508, %v506
        %v523 = vpack.c.bf16 %v509, %v507
        %v524 = vpack.c.bf16 %v512, %v510
        %v525 = vpack.c.bf16 %v513, %v511
        %v526 = vpack.c.bf16 %v516, %v514
        %v527 = vpack.c.bf16 %v517, %v515
        %v528 = vpack.c.bf16 %v518, %v518
        %v529 = vpack.c.bf16 %v519, %v519
        %vm530 = vcmask 588800
        %v532 = vsel %vm530, %v425, 0
        %v535 = vsel %vm377, %v528, 0
        %v538 = vsel %vm377, %v529, 0
        %540 = vmatprep.subr.bf16.mxu0 0
        %541 = vmatpush1.bf16.msra.mxu0 0
        %542 = vmatprep.subr.bf16.mxu0 0
        %543 = vmatpush1.bf16.msra.mxu0 0
        %544 = vmatprep.subr.bf16.mxu0 0
        %545 = vmatpush1.bf16.msra.mxu0 0
        %546 = vmatprep.subr.bf16.mxu0 %v538
        %547 = vmatpush1.bf16.msra.mxu0 %v535
        %548 = vmatprep.subr.bf16.mxu0 %v527
        %549 = vmatpush1.bf16.msra.mxu0 %v526
        %550 = vmatprep.subr.bf16.mxu0 %v525
        %551 = vmatpush1.bf16.msra.mxu0 %v524
        %552 = vmatprep.subr.bf16.mxu0 %v523
        %553 = vmatpush1.bf16.msra.mxu0 %v522
        %554 = vmatprep.subr.bf16.mxu0 %v521
        %555 = vmatpush1.bf16.msra.mxu0 %v520
        %556 = vmatprep.subr.bf16.mxu0 0
        %557 = vmatpush2.bf16.msra.mxu0 0
        %558 = vmatprep.subr.bf16.mxu0 0
        %559 = vmatpush2.bf16.msra.mxu0 0
        %560 = vmatprep.subr.bf16.mxu0 0
        %561 = vmatpush2.bf16.msra.mxu0 0
        %562 = vmatprep.subr.bf16.mxu0 0
        %563 = vmatpush2.bf16.msra.mxu0 0
        %564 = vmatprep.subr.bf16.mxu0 0
        %565 = vmatpush2.bf16.msra.mxu0 0
        %566 = vmatprep.subr.bf16.mxu0 0
        %567 = vmatpush2.bf16.msra.mxu0 0
        %568 = vmatprep.subr.bf16.mxu0 0
        %569 = vmatpush2.bf16.msra.mxu0 0
        %570 = vmatprep.subr.bf16.mxu0 0
        %571 = vmatpush2.bf16.msra.mxu0 0
        %572 = vmatprep.mubr.bf16.mxu0 0
        %573 = vmatmul.mubr.bf16.gmra.mxu0 %v532
        %v574 = vpop.f32.mrf.mxu0
        %v575 = vadd.f32 0.0, %v574
        %v576 = vpop.f32.mrf.mxu0
        %v577 = vadd.f32 0.0, %v576
        %v578 = vpop.f32.mrf.mxu0
        %v579 = vpop.f32.mrf.mxu0
        %580 = vdwg.mxu0
        %v581 = vld [vmem:[%s5] sm:$0xff]
        %583 = vset.pattern.permute.xlu0 0
        %584 = vperm.xlu0 %583, %v581
        %v585 = vpop.permute.xlu0 %584
        %v587 = vmul.f32 %v575, %v585
        %v588 = vmul.f32 %v577, %v585
        %v589 = vld [vmem:[%s6] sm:$0xff]
        %591 = vset.pattern.permute.xlu0 0
        %592 = vperm.xlu0 %591, %v589
        %v593 = vpop.permute.xlu0 %592
        %v595 = vadd.f32 %v587, %v593
        %v596 = vadd.f32 %v588, %v593
        %v597 = vmax.f32 %v595, 0.0
        %v598 = vmax.f32 %v596, 0.0
        %v599 = vld [vmem:[%s7] sm:$0xf]
        %600 = vrot.lane.b32.xlu0 %v597, 17
        %v601 = vpop.permute.xlu0 %600
        %602 = vrot.lane.b32.xlu0 %v598, 17
        %v603 = vpop.permute.xlu0 %602
        %v604 = vsel %vm432, %v601, %v603
        %v605 = vsel %vm432, %v603, %v601
        %606 = vrot.lane.b32.xlu0 %v597, 16
        %v607 = vpop.permute.xlu0 %606
        %608 = vrot.lane.b32.xlu0 %v598, 16
        %v609 = vpop.permute.xlu0 %608
        %v610 = vsel %vm439, %v607, %v609
        %v611 = vsel %vm439, %v609, %v607
        %612 = vrot.lane.b32.xlu0 %v597, 15
        %v613 = vpop.permute.xlu0 %612
        %614 = vrot.lane.b32.xlu0 %v598, 15
        %v615 = vpop.permute.xlu0 %614
        %v616 = vsel %vm446, %v613, %v615
        %v617 = vsel %vm446, %v615, %v613
        %618 = vrot.lane.b32.xlu0 %v597, 1
        %v619 = vpop.permute.xlu0 %618
        %620 = vrot.lane.b32.xlu0 %v598, 1
        %v621 = vpop.permute.xlu0 %620
        %v622 = vsel %vm453, %v619, %v621
        %v623 = vsel %vm453, %v621, %v619
        %624 = vrot.lane.b32.xlu0 %v597, 127
        %v625 = vpop.permute.xlu0 %624
        %626 = vrot.lane.b32.xlu0 %v598, 127
        %v627 = vpop.permute.xlu0 %626
        %v628 = vsel %vm460, %v625, %v627
        %v629 = vsel %vm460, %v627, %v625
        %630 = vrot.lane.b32.xlu0 %v597, 113
        %v631 = vpop.permute.xlu0 %630
        %632 = vrot.lane.b32.xlu0 %v598, 113
        %v633 = vpop.permute.xlu0 %632
        %v634 = vsel %vm467, %v631, %v633
        %v635 = vsel %vm467, %v633, %v631
        %636 = vrot.lane.b32.xlu0 %v597, 112
        %v637 = vpop.permute.xlu0 %636
        %638 = vrot.lane.b32.xlu0 %v598, 112
        %v639 = vpop.permute.xlu0 %638
        %v640 = vsel %vm474, %v637, %v639
        %v641 = vsel %vm474, %v639, %v637
        %642 = vrot.lane.b32.xlu0 %v597, 111
        %v643 = vpop.permute.xlu0 %642
        %644 = vrot.lane.b32.xlu0 %v598, 111
        %v645 = vpop.permute.xlu0 %644
        %v646 = vsel %vm481, %v643, %v645
        %v647 = vsel %vm481, %v645, %v643
        %v648 = vmul.f32 %v605, %v484
        %v649 = vmul.f32 %v604, %v485
        %v650 = vmul.f32 %v611, %v486
        %v651 = vmul.f32 %v610, %v487
        %v652 = vmul.f32 %v617, %v488
        %v653 = vmul.f32 %v616, %v489
        %v654 = vmul.f32 %v623, %v490
        %v655 = vmul.f32 %v622, %v491
        %v656 = vmul.f32 %v597, %v492
        %v657 = vmul.f32 %v598, %v493
        %v658 = vmul.f32 %v628, %v494
        %v659 = vmul.f32 %v629, %v495
        %v660 = vmul.f32 %v634, %v496
        %v661 = vmul.f32 %v635, %v497
        %v662 = vmul.f32 %v640, %v498
        %v663 = vmul.f32 %v641, %v499
        %v664 = vmul.f32 %v646, %v500
        %v665 = vmul.f32 %v647, %v501
        %v666 = vpack.c.bf16 %v650, %v648
        %v667 = vpack.c.bf16 %v651, %v649
        %v668 = vpack.c.bf16 %v654, %v652
        %v669 = vpack.c.bf16 %v655, %v653
        %v670 = vpack.c.bf16 %v658, %v656
        %v671 = vpack.c.bf16 %v659, %v657
        %v672 = vpack.c.bf16 %v662, %v660
        %v673 = vpack.c.bf16 %v663, %v661
        %v674 = vpack.c.bf16 %v664, %v664
        %v675 = vpack.c.bf16 %v665, %v665
        %v677 = vsel %vm530, %v599, 0
        %v680 = vsel %vm377, %v674, 0
        %v683 = vsel %vm377, %v675, 0
        %685 = vmatprep.subr.bf16.mxu0 0
        %686 = vmatpush1.bf16.msra.mxu0 0
        %687 = vmatprep.subr.bf16.mxu0 0
        %688 = vmatpush1.bf16.msra.mxu0 0
        %689 = vmatprep.subr.bf16.mxu0 0
        %690 = vmatpush1.bf16.msra.mxu0 0
        %691 = vmatprep.subr.bf16.mxu0 %v683
        %692 = vmatpush1.bf16.msra.mxu0 %v680
        %693 = vmatprep.subr.bf16.mxu0 %v673
        %694 = vmatpush1.bf16.msra.mxu0 %v672
        %695 = vmatprep.subr.bf16.mxu0 %v671
        %696 = vmatpush1.bf16.msra.mxu0 %v670
        %697 = vmatprep.subr.bf16.mxu0 %v669
        %698 = vmatpush1.bf16.msra.mxu0 %v668
        %699 = vmatprep.subr.bf16.mxu0 %v667
        %700 = vmatpush1.bf16.msra.mxu0 %v666
        %701 = vmatprep.subr.bf16.mxu0 0
        %702 = vmatpush2.bf16.msra.mxu0 0
        %703 = vmatprep.subr.bf16.mxu0 0
        %704 = vmatpush2.bf16.msra.mxu0 0
        %705 = vmatprep.subr.bf16.mxu0 0
        %706 = vmatpush2.bf16.msra.mxu0 0
        %707 = vmatprep.subr.bf16.mxu0 0
        %708 = vmatpush2.bf16.msra.mxu0 0
        %709 = vmatprep.subr.bf16.mxu0 0
        %710 = vmatpush2.bf16.msra.mxu0 0
        %711 = vmatprep.subr.bf16.mxu0 0
        %712 = vmatpush2.bf16.msra.mxu0 0
        %713 = vmatprep.subr.bf16.mxu0 0
        %714 = vmatpush2.bf16.msra.mxu0 0
        %715 = vmatprep.subr.bf16.mxu0 0
        %716 = vmatpush2.bf16.msra.mxu0 0
        %717 = vmatprep.mubr.bf16.mxu0 0
        %718 = vmatmul.mubr.bf16.gmra.mxu0 %v677
        %v719 = vpop.f32.mrf.mxu0
        %v720 = vadd.f32 %v419, %v719
        %v721 = vpop.f32.mrf.mxu0
        %v722 = vadd.f32 %v421, %v721
        %v723 = vpop.f32.mrf.mxu0
        %v724 = vpop.f32.mrf.mxu0
        %725 = vdwg.mxu0
        %726 = vst [vmem:[%s341] sm:$0xff] %v720
        %727 = vst [vmem:[%s341 + $0x8] sm:$0xff] %v722
        %s728 = sand.u32 %s226, 1
        %s729 = scalar_lea.sflag [#allocation4], %s728
        %s730 = sand.u32 %s226, 1
        %s731 = smul.addr %s730, 16
        %s732 = scalar_lea.vmem [#allocation5], %s731
        // Predicated region
        $region61: #{tpu_custom_call.1} parent=55 // pred_check
          %p733 = pneg %p236
        $region62: #{tpu_custom_call.1} parent=55 // pred_check_branch
          %735 = sbr.rel (%p733) target = $region64
        $region63: #{tpu_custom_call.1} parent=55 // pred_region
          %s736 = smul.u32 2, %s24
          %s738 = ssub.s32 256, 256
          %739 = vsyncadd %s729, %s738
          %s740 = smul.addr %s736, 128
          %s741 = scalar_lea.hbm %s9, %s740
          %s743 = sshll.u32 %s732, 4
          %s744 = int_to_ptr.vmem [resolvable:$true] %s743
          %746 = dma.vmem_to_hbm [thread:$0]  %s744, 256, %s741, %s729
        $region64: #{tpu_custom_call.1} parent=55 // pred_fallthru
          _
      $region56: #{tpu_custom_call.1} parent=5 // pred_fallthru
        _
      %p747 = scmp.le.s32.totalorder 2, %s19
      // Predicated region
      $region65: #{tpu_custom_call.1} parent=5 // pred_check
        %p748 = pneg %p747
      $region66: #{tpu_custom_call.1} parent=5 // pred_check_branch
        %750 = sbr.rel (%p748) target = $region68
      $region67: #{tpu_custom_call.1} parent=5 // pred_region
        %s751 = ssub.s32 %s19, 2
        // Predicated region
        $region69: #{tpu_custom_call.1} parent=67 // pred_check
          %p752 = pneg %p242
        $region70: #{tpu_custom_call.1} parent=67 // pred_check_branch
          %754 = sbr.rel (%p752) target = $region72
        $region71: #{tpu_custom_call.1} parent=67 // pred_region
          %s755 = sand.u32 %s227, 1
          %s756 = scalar_lea.sflag [#allocation4], %s755
          %s757 = sand.u32 %s227, 1
          %s758 = smul.addr %s757, 16
          %s759 = scalar_lea.vmem [#allocation5], %s758
          %760 = dma.done %s756, 256
        $region72: #{tpu_custom_call.1} parent=67 // pred_fallthru
          _
      $region68: #{tpu_custom_call.1} parent=5 // pred_fallthru
        _
    $region6: #{tpu_custom_call.1} parent=1 // loop_footer
      %s23 = sadd.s32 1, %s19
    $region7: #{tpu_custom_call.1} parent=1 // loop_footer_branch
      %18 = sbr.rel target = $region3
    $region8: #{tpu_custom_call.1} parent=1 // loop_exit
      _
    %761 = vsyncpa [#allocation3], 1
    %s762 = scalar_lea.sflag [#allocation3], 1
    %763 = vsyncpa %s762, 1
    %764 = vsyncpa [#allocation4], 1
    %s765 = scalar_lea.sflag [#allocation4], 1
    %766 = vsyncpa %s765, 1

</llo_original>
